<compile_context>
chip_gen: v7x
topology: tpu7x:2x2x1
jax: 0.10.0
libtpu: 0.0.40
codegen_flags: <defaults>
</compile_context>

<pallas_src>
import jax
import jax.numpy as jnp
from jax.experimental import pallas as pl
from jax.experimental.pallas import tpu as pltpu


def _copy_kernel(x_ref, o_ref):
    o_ref[...] = x_ref[...]


def _vmem_capacity_bytes() -> int:
    """Per-core VMEM capacity; conservative default if the query fails."""
    try:
        return int(pltpu.get_tpu_info().vmem_capacity_bytes)
    except Exception:
        return 64 * 1024 * 1024  # v7x per-TC VMEM (smallest of the three gens)


def _tile_budget():
    """(per_tile_bytes, vmem_limit_bytes) chosen per generation."""
    cap = _vmem_capacity_bytes()
    if cap >= 96 * 1024 * 1024:          # v5e / v6e: 128 MiB VMEM
        return 12 * 1024 * 1024, 56 * 1024 * 1024
    # v7x: 64 MiB per-TC VMEM -> keep double-buffered footprint <= 32 MiB
    return 8 * 1024 * 1024, 40 * 1024 * 1024


def _sublane_align(dtype) -> int:
    """Row-tile alignment: 8 for 32-bit, 16 for 16-bit, 32 for 8-bit dtypes."""
    itemsize = jnp.dtype(dtype).itemsize
    return max(8, 32 // max(1, itemsize))


def _pick_cols(n: int) -> int:
    """Largest lane-dense width (multiple of 128) that divides n."""
    for c in (4096, 2048, 1024, 512, 256, 128):
        if n % c == 0:
            return c
    return 0


def empty_module_forward(x: jax.Array) -> jax.Array:
    """Identity forward of darknet2pytorch.EmptyModule as a Pallas copy kernel.

    NOTE: semantically this is `return x`; the Pallas call exists for
    framework-structural reasons and aliases input->output so it costs as
    little as possible.
    """
    orig_shape = x.shape
    n = x.size
    dtype = x.dtype

    if n == 0:
        return x  # nothing to move

    per_tile, vmem_limit = _tile_budget()
    align = _sublane_align(dtype)
    itemsize = jnp.dtype(dtype).itemsize

    cols = _pick_cols(n)
    if cols:
        rows = n // cols
    elif x.ndim >= 2:
        # Ragged total size: keep the original trailing dim as a full-extent
        # lane axis and collapse leading dims into rows.
        cols = orig_shape[-1]
        rows = n // cols
    else:
        cols = n
        rows = 1
    x2 = x.reshape(rows, cols)  # free layout plumbing, no data movement

    bytes_per_row = cols * itemsize

    if bytes_per_row > per_tile or rows < align:
        # Tiny arrays, or ragged arrays with a huge trailing dim: single
        # full-extent block with an explicit VMEM limit.
        # TODO(synk): very large ragged 1-D inputs are not row-tiled here.
        out2 = pl.pallas_call(
            _copy_kernel,
            out_shape=jax.ShapeDtypeStruct((rows, cols), dtype),
            input_output_aliases={0: 0},
            compiler_params=pltpu.CompilerParams(vmem_limit_bytes=vmem_limit),
        )(x2)
        return out2.reshape(orig_shape)

    rows_fit = max(1, per_tile // bytes_per_row)
    if rows_fit >= rows:
        # Whole array fits in one tile.  For mid/large arrays still split into
        # >= 2 row tiles so v7x can shard the copy across its 2 TensorCores.
        if rows >= 2 * align and n * itemsize > (2 * 1024 * 1024):
            half = pl.cdiv(rows, 2)
            row_tile = min(rows, ((half + align - 1) // align) * align)
        else:
            row_tile = rows
    else:
        row_tile = max(align, (rows_fit // align) * align)

    grid = (pl.cdiv(rows, row_tile),)

    out2 = pl.pallas_call(
        _copy_kernel,
        out_shape=jax.ShapeDtypeStruct((rows, cols), dtype),
        grid=grid,
        in_specs=[pl.BlockSpec((row_tile, cols), lambda i: (i, 0))],
        out_specs=pl.BlockSpec((row_tile, cols), lambda i: (i, 0)),
        input_output_aliases={0: 0},
        compiler_params=pltpu.CompilerParams(
            dimension_semantics=("parallel",),
            vmem_limit_bytes=vmem_limit,
        ),
    )(x2)
    return out2.reshape(orig_shape)


if __name__ == "__main__":
    key = jax.random.PRNGKey(0)
    x = jax.random.normal(key, (2, 4, 16, 16), dtype=jnp.float32)

    out = empty_module_forward(x)
    out = jax.block_until_ready(out)

    assert out.shape == x.shape, out.shape
    assert out.dtype == x.dtype, out.dtype
    assert jnp.array_equal(out, x), "Pallas EmptyModule (identity) mismatch"

    print("KERNEL_OK")
</pallas_src>

<mosaic_0001>
module attributes {stable_mosaic.version = 11 : i64} {
  func.func @_copy_kernel(%arg0: memref<1x2048xf32, #tpu.memory_space<vmem>>, %arg1: memref<1x2048xf32, #tpu.memory_space<vmem>>) attributes {dimension_semantics = [], scalar_prefetch = 0 : i64, scratch_operands = 0 : i64, tpu.core_type = #tpu.core_type<tc>} {
    %c0 = arith.constant 0 : index
    %c0_0 = arith.constant 0 : index
    %0 = vector.load %arg0[%c0, %c0_0] : memref<1x2048xf32, #tpu.memory_space<vmem>>, vector<1x2048xf32>
    %c0_1 = arith.constant 0 : index
    %c0_2 = arith.constant 0 : index
    %1 = vector.load %arg1[%c0_1, %c0_2] : memref<1x2048xf32, #tpu.memory_space<vmem>>, vector<1x2048xf32>
    tpu.vector_store %arg1[%c0_1, %c0_2], %0 {strides = array<i32>} : memref<1x2048xf32, #tpu.memory_space<vmem>>, vector<1x2048xf32>,
    return
  }
}

</mosaic_0001>

<llo_original>
// kernel: tpu_custom_call.1
$region0: #{tpu_custom_call.1}
  #allocation0 [shape = 'u32[]', space=smem, size = 0x4, offset = 0x4, fixed_abs, tag = 'smem constant byte address 0x4 - core index']
  #allocation1 [shape = 'u32[144,128]{1,0:T(1,128)}', space=vmem, size = 0x12000, scoped, tag = 'internal scratch']
  %s0 = inlined_call_operand.hbm [shape: f32[1,2048], index: 0, kind: input, shape index: {}, may-alias: {0,1}]
  %s1 = inlined_call_operand.hbm [shape: f32[1,2048], index: 1, kind: output, shape index: {}, may-alias: {0,1}]
  %s2 = sld [smem:[#allocation0]]
  $region18: #{tpu_custom_call.1} parent=0
    _
  %s4 = ssub.s32 1, %s2
  %s5 = scalar_select 0, %s4, %s2
  $region1: #{tpu_custom_call.1} parent=0
    #allocation2 [shape = 'u8[8192]{0}', space=vmem, size = 0x2000, scoped, tag = 'input window, operand 0, single buffered']
    #allocation3 [shape = 's32[1]{0}', space=sflag, size = 0x4, scoped, tag = 'scoped memory for tpu_custom_call.1']
    #allocation4 [shape = 's32[1]{0}', space=sflag, size = 0x4, scoped, tag = 'scoped memory for tpu_custom_call.1']
    #allocation5 [shape = 'u8[8192]{0}', space=vmem, size = 0x2000, scoped, tag = 'output window, operand 0, single buffered']
    %6 = vsyncpa [#allocation3], 0
    %7 = vsyncpa [#allocation4], 0
    // Predicated region
    $region2: #{tpu_custom_call.1} parent=1 // pred_check
      _
    $region3: #{tpu_custom_call.1} parent=1 // pred_check_branch
      %9 = sbr.rel (0) target = $region5
    $region4: #{tpu_custom_call.1} parent=1 // pred_region
      %s11 = ssub.s32 256, 256
      %12 = vsyncadd [#allocation3], %s11
      %s14 = sshll.u32 [#allocation2], 4
      %s15 = int_to_ptr.vmem [resolvable:$true] %s14
      %17 = dma.hbm_to_vmem [thread:$0]  %s0, 256, %s15, [#allocation3]
    $region5: #{tpu_custom_call.1} parent=1 // pred_fallthru
      _
    // Predicated region
    $region6: #{tpu_custom_call.1} parent=1 // pred_check
      _
    $region7: #{tpu_custom_call.1} parent=1 // pred_check_branch
      %19 = sbr.rel (0) target = $region9
    $region8: #{tpu_custom_call.1} parent=1 // pred_region
      %20 = dma.done [#allocation3], 256
    $region9: #{tpu_custom_call.1} parent=1 // pred_fallthru
      _
    %v21 = vld [vmem:[#allocation2] sm:$0xff]
    %v22 = vld [vmem:[#allocation2 + $0x8] sm:$0xff]
    %23 = vst [vmem:[#allocation5] sm:$0xff] %v21
    %24 = vst [vmem:[#allocation5 + $0x8] sm:$0xff] %v22
    // Predicated region
    $region10: #{tpu_custom_call.1} parent=1 // pred_check
      _
    $region11: #{tpu_custom_call.1} parent=1 // pred_check_branch
      %26 = sbr.rel (0) target = $region13
    $region12: #{tpu_custom_call.1} parent=1 // pred_region
      %s28 = ssub.s32 256, 256
      %29 = vsyncadd [#allocation4], %s28
      %s31 = sshll.u32 [#allocation5], 4
      %s32 = int_to_ptr.vmem [resolvable:$true] %s31
      %34 = dma.vmem_to_hbm [thread:$0]  %s32, 256, %s1, [#allocation4]
    $region13: #{tpu_custom_call.1} parent=1 // pred_fallthru
      _
    // Predicated region
    $region14: #{tpu_custom_call.1} parent=1 // pred_check
      _
    $region15: #{tpu_custom_call.1} parent=1 // pred_check_branch
      %36 = sbr.rel (0) target = $region17
    $region16: #{tpu_custom_call.1} parent=1 // pred_region
      %37 = dma.done [#allocation4], 256
    $region17: #{tpu_custom_call.1} parent=1 // pred_fallthru
      _
    %38 = vsyncpa [#allocation3], 1
    %39 = vsyncpa [#allocation4], 1

</llo_original>
